<compile_context>
chip_gen: v5e
topology: v5e:2x2
jax: 0.10.0
libtpu: 0.0.40
codegen_flags: <defaults>
</compile_context>

<pallas_src>
import jax
import jax.numpy as jnp
from jax import lax
from jax.experimental import pallas as pl
from jax.experimental.pallas import tpu as pltpu


_CHUNK = 512  # lanes processed per inner-loop step (multiple of 128)


def _round_up(n, m):
    return ((n + m - 1) // m) * m


def _mlp_kernel(xT_ref, w1_ref, b1_ref, w2_ref, b2_ref, o_ref):
    # xT_ref: (3, TB)   w1_ref: (H, 3)   b1_ref: (H, 1)   <- already *0.5 folded
    # w2_ref: (H, 1)    b2_ref: (1, 1)   o_ref:  (1, TB)  <- already tanh-folded
    w1 = w1_ref[...]          # (H, 3)
    b1 = b1_ref[...]          # (H, 1)
    w2 = w2_ref[...]          # (H, 1)
    b2 = b2_ref[...]          # (1, 1)

    tb = o_ref.shape[1]
    n_chunks = tb // _CHUNK

    def body(c, carry):
        off = pl.multiple_of(c * _CHUNK, _CHUNK)
        xt = xT_ref[:, pl.ds(off, _CHUNK)]                    # (3, CHUNK)

        # linear1 (K = 3): three broadcast FMAs on the VPU, no MXU.
        h = (w1[:, 0:1] * xt[0:1, :]
             + w1[:, 1:2] * xt[1:2, :]
             + w1[:, 2:3] * xt[2:3, :]
             + b1)                                            # (H, CHUNK)

        # sigmoid was folded into a single tanh (EUP) host-side.
        t = jnp.tanh(h)                                       # (H, CHUNK)

        # linear2 (N = 1): multiply + cross-sublane reduce (XLU).
        out = jnp.sum(t * w2, axis=0, keepdims=True) + b2     # (1, CHUNK)
        o_ref[:, pl.ds(off, _CHUNK)] = out.astype(o_ref.dtype)
        return carry

    lax.fori_loop(0, n_chunks, body, 0, unroll=True)


def extinction_network_forward(x, w1, b1, w2, b2, *, tile_b=8192,
                               small_batch_cutoff=512, x_feature_major=False):
    """Forward pass of ExtinctionNetwork.

    x : (B, 3) f32  — or (3, B) if x_feature_major=True, which skips the
        wrapper-side transpose (an extra full HBM pass) when the producer can
        supply the feature-major layout directly.
    w1: (H, 3) f32   b1: (H,) f32    (torch linear1 layout)
    w2: (1, H) f32   b2: (1,) f32    (torch linear2 layout)
    returns (B, 1) f32
    """
    assert tile_b % _CHUNK == 0, "tile_b must be a multiple of the lane chunk"
    H = w1.shape[0]
    B = x.shape[1] if x_feature_major else x.shape[0]

    # Small-batch fast path: fused XLA beats a single-tile pallas launch.
    if B <= small_batch_cutoff:
        xb = x.T if x_feature_major else x                    # (B, 3)
        return jnp.dot(jax.nn.sigmoid(jnp.dot(xb, w1.T) + b1), w2.T) + b2

    # TODO(synk): for maximum end-to-end perf, pass x already feature-major
    # (x_feature_major=True) so this transpose pass is fused into the producer.
    xT = x if x_feature_major else x.T                        # (3, B)

    # Fold sigmoid -> tanh constants into the (tiny) parameters host-side:
    #   w2 @ sigmoid(W1 x + b1) + b2
    #     = (0.5*w2) @ tanh(0.5*W1 x + 0.5*b1) + (b2 + 0.5*sum(w2))
    w1h = (0.5 * w1)                                          # (H, 3)
    b1c = (0.5 * b1).reshape(H, 1)                            # (H, 1)
    w2c = (0.5 * w2).reshape(H, 1)                            # (H, 1)
    b2c = (b2 + 0.5 * jnp.sum(w2)).reshape(1, 1)              # (1, 1)

    # Tile selection: large lane-dense tiles (multiple of _CHUNK); keep the
    # grid >= 2 steps when possible so v7x's two TensorCores both get work.
    pad_b = _round_up(B, _CHUNK)
    if pad_b >= 2 * _CHUNK:
        tb = min(tile_b, _round_up(pad_b // 2, _CHUNK))
    else:
        tb = pad_b
    pad_b = _round_up(pad_b, tb)

    if pad_b != xT.shape[1]:
        xT = jnp.pad(xT, ((0, 0), (0, pad_b - xT.shape[1])))

    grid = (pad_b // tb,)
    out = pl.pallas_call(
        _mlp_kernel,
        out_shape=jax.ShapeDtypeStruct((1, pad_b), jnp.float32),
        grid=grid,
        in_specs=[
            pl.BlockSpec((3, tb), lambda i: (0, i)),          # streamed batch tiles
            pl.BlockSpec((H, 3), lambda i: (0, 0)),           # weights VMEM-resident
            pl.BlockSpec((H, 1), lambda i: (0, 0)),
            pl.BlockSpec((H, 1), lambda i: (0, 0)),
            pl.BlockSpec((1, 1), lambda i: (0, 0)),
        ],
        out_specs=pl.BlockSpec((1, tb), lambda i: (0, i)),    # lane-dense output
        compiler_params=pltpu.CompilerParams(
            dimension_semantics=("parallel",)),
    )(xT, w1h, b1c, w2c, b2c)

    return out[:, :B].T  # (B, 1); transpose of a (1, B) slab is a free reshape


def init_params(hidden_size, key):
    """Deterministic init mimicking nn.Linear's U(-1/sqrt(fan_in), +1/sqrt(fan_in))."""
    k1, k2, k3, k4 = jax.random.split(key, 4)
    bound1 = 1.0 / jnp.sqrt(3.0)
    bound2 = 1.0 / jnp.sqrt(float(hidden_size))
    w1 = jax.random.uniform(k1, (hidden_size, 3), jnp.float32, -bound1, bound1)
    b1 = jax.random.uniform(k2, (hidden_size,), jnp.float32, -bound1, bound1)
    w2 = jax.random.uniform(k3, (1, hidden_size), jnp.float32, -bound2, bound2)
    b2 = jax.random.uniform(k4, (1,), jnp.float32, -bound2, bound2)
    return w1, b1, w2, b2


if __name__ == "__main__":
    key = jax.random.PRNGKey(0)
    k_small, k_tiled, k_param = jax.random.split(key, 3)

    hidden_size = 32
    w1, b1, w2, b2 = init_params(hidden_size, k_param)

    def ref_fwd(xx):
        return jnp.dot(jax.nn.sigmoid(jnp.dot(xx, w1.T) + b1), w2.T) + b2

    # "small" exercises the fast path (module example shape);
    # "tiled" forces the Pallas kernel with a multi-step grid, inner chunk loop,
    # and lane padding (1500 -> 2048 lanes, 2 grid steps of 1024).
    for name, batch, kk in (("small", 8, k_small), ("tiled", 1500, k_tiled)):
        x = jax.random.normal(kk, (batch, 3), jnp.float32)
        out = jax.block_until_ready(extinction_network_forward(x, w1, b1, w2, b2))
        ref = ref_fwd(x)
        assert out.shape == (batch, 1), (name, out.shape)
        max_err = float(jnp.max(jnp.abs(out - ref)))
        # tanh reformulation is exact -> tighter tolerance than the old approx path
        assert jnp.allclose(out, ref, atol=1e-4, rtol=1e-4), (name, max_err)

    print("KERNEL_OK")
</pallas_src>

<mosaic_0001>
module attributes {stable_mosaic.version = 11 : i64} {
  func.func @_mlp_kernel(%arg0: i32, %arg1: memref<3x1024xf32, #tpu.memory_space<vmem>>, %arg2: memref<32x3xf32, #tpu.memory_space<vmem>>, %arg3: memref<32x1xf32, #tpu.memory_space<vmem>>, %arg4: memref<32x1xf32, #tpu.memory_space<vmem>>, %arg5: memref<1x1xf32, #tpu.memory_space<vmem>>, %arg6: memref<1x1024xf32, #tpu.memory_space<vmem>>) attributes {dimension_semantics = [#tpu.dimension_semantics<parallel>], iteration_bounds = array<i64: 2>, scalar_prefetch = 0 : i64, scratch_operands = 0 : i64, tpu.core_type = #tpu.core_type<tc>, window_params = [{transform_indices = @transform_0, window_bounds = array<i64: 3, 1024>}, {pipeline_mode = #tpu.pipeline_mode<synchronous>, transform_indices = @transform_1, window_bounds = array<i64: 32, 3>}, {pipeline_mode = #tpu.pipeline_mode<synchronous>, transform_indices = @transform_2, window_bounds = array<i64: 32, 1>}, {pipeline_mode = #tpu.pipeline_mode<synchronous>, transform_indices = @transform_3, window_bounds = array<i64: 32, 1>}, {pipeline_mode = #tpu.pipeline_mode<synchronous>, transform_indices = @transform_4, window_bounds = array<i64: 1, 1>}, {transform_indices = @transform_5, window_bounds = array<i64: 1, 1024>}]} {
    %c0 = arith.constant 0 : index
    %c0_0 = arith.constant 0 : index
    %0 = vector.load %arg2[%c0, %c0_0] : memref<32x3xf32, #tpu.memory_space<vmem>>, vector<32x3xf32>
    %c0_1 = arith.constant 0 : index
    %c0_2 = arith.constant 0 : index
    %1 = vector.load %arg3[%c0_1, %c0_2] : memref<32x1xf32, #tpu.memory_space<vmem>>, vector<32x1xf32>
    %c0_3 = arith.constant 0 : index
    %c0_4 = arith.constant 0 : index
    %2 = vector.load %arg4[%c0_3, %c0_4] : memref<32x1xf32, #tpu.memory_space<vmem>>, vector<32x1xf32>
    %c0_5 = arith.constant 0 : index
    %c0_6 = arith.constant 0 : index
    %3 = vector.load %arg5[%c0_5, %c0_6] : memref<1x1xf32, #tpu.memory_space<vmem>>, vector<1x1xf32>
    %c0_i32 = arith.constant 0 : i32
    %c512_i32 = arith.constant 512 : i32
    %4 = arith.muli %c0_i32, %c512_i32 : i32
    %5 = tpu.assume_multiple %4, 512 : i32
    %c0_7 = arith.constant 0 : index
    %6 = arith.index_cast %5 : i32 to index
    %7 = vector.load %arg1[%c0_7, %6] : memref<3x1024xf32, #tpu.memory_space<vmem>>, vector<3x512xf32>
    %8 = vector.extract_strided_slice %0 {offsets = [0, 0], sizes = [32, 1], strides = [1, 1]} : vector<32x3xf32> to vector<32x1xf32>
    %9 = vector.extract_strided_slice %7 {offsets = [0, 0], sizes = [1, 512], strides = [1, 1]} : vector<3x512xf32> to vector<1x512xf32>
    %10 = vector.broadcast %8 : vector<32x1xf32> to vector<32x512xf32>
    %11 = vector.broadcast %9 : vector<1x512xf32> to vector<32x512xf32>
    %12 = arith.mulf %10, %11 : vector<32x512xf32>
    %13 = vector.extract_strided_slice %0 {offsets = [0, 1], sizes = [32, 1], strides = [1, 1]} : vector<32x3xf32> to vector<32x1xf32>
    %14 = vector.extract_strided_slice %7 {offsets = [1, 0], sizes = [1, 512], strides = [1, 1]} : vector<3x512xf32> to vector<1x512xf32>
    %15 = vector.broadcast %13 : vector<32x1xf32> to vector<32x512xf32>
    %16 = vector.broadcast %14 : vector<1x512xf32> to vector<32x512xf32>
    %17 = arith.mulf %15, %16 : vector<32x512xf32>
    %18 = arith.addf %12, %17 : vector<32x512xf32>
    %19 = vector.extract_strided_slice %0 {offsets = [0, 2], sizes = [32, 1], strides = [1, 1]} : vector<32x3xf32> to vector<32x1xf32>
    %20 = vector.extract_strided_slice %7 {offsets = [2, 0], sizes = [1, 512], strides = [1, 1]} : vector<3x512xf32> to vector<1x512xf32>
    %21 = vector.broadcast %19 : vector<32x1xf32> to vector<32x512xf32>
    %22 = vector.broadcast %20 : vector<1x512xf32> to vector<32x512xf32>
    %23 = arith.mulf %21, %22 : vector<32x512xf32>
    %24 = arith.addf %18, %23 : vector<32x512xf32>
    %25 = vector.broadcast %1 : vector<32x1xf32> to vector<32x512xf32>
    %26 = arith.addf %24, %25 : vector<32x512xf32>
    %27 = math.tanh %26 : vector<32x512xf32>
    %28 = vector.broadcast %2 : vector<32x1xf32> to vector<32x512xf32>
    %29 = arith.mulf %27, %28 : vector<32x512xf32>
    %cst = arith.constant dense<0.000000e+00> : vector<512xf32>
    %30 = vector.multi_reduction <add>, %29, %cst [0] : vector<32x512xf32> to vector<512xf32>
    %31 = vector.shape_cast %30 : vector<512xf32> to vector<1x512xf32>
    %32 = vector.broadcast %3 : vector<1x1xf32> to vector<1x512xf32>
    %33 = arith.addf %31, %32 : vector<1x512xf32>
    %c0_8 = arith.constant 0 : index
    %34 = arith.index_cast %5 : i32 to index
    %35 = vector.load %arg6[%c0_8, %34] : memref<1x1024xf32, #tpu.memory_space<vmem>>, vector<1x512xf32>
    tpu.vector_store %arg6[%c0_8, %34], %33 {strides = array<i32>} : memref<1x1024xf32, #tpu.memory_space<vmem>>, vector<1x512xf32>,
    %c1_i32 = arith.constant 1 : i32
    %c512_i32_9 = arith.constant 512 : i32
    %36 = arith.muli %c1_i32, %c512_i32_9 : i32
    %37 = tpu.assume_multiple %36, 512 : i32
    %c0_10 = arith.constant 0 : index
    %38 = arith.index_cast %37 : i32 to index
    %39 = vector.load %arg1[%c0_10, %38] : memref<3x1024xf32, #tpu.memory_space<vmem>>, vector<3x512xf32>
    %40 = vector.extract_strided_slice %0 {offsets = [0, 0], sizes = [32, 1], strides = [1, 1]} : vector<32x3xf32> to vector<32x1xf32>
    %41 = vector.extract_strided_slice %39 {offsets = [0, 0], sizes = [1, 512], strides = [1, 1]} : vector<3x512xf32> to vector<1x512xf32>
    %42 = vector.broadcast %40 : vector<32x1xf32> to vector<32x512xf32>
    %43 = vector.broadcast %41 : vector<1x512xf32> to vector<32x512xf32>
    %44 = arith.mulf %42, %43 : vector<32x512xf32>
    %45 = vector.extract_strided_slice %0 {offsets = [0, 1], sizes = [32, 1], strides = [1, 1]} : vector<32x3xf32> to vector<32x1xf32>
    %46 = vector.extract_strided_slice %39 {offsets = [1, 0], sizes = [1, 512], strides = [1, 1]} : vector<3x512xf32> to vector<1x512xf32>
    %47 = vector.broadcast %45 : vector<32x1xf32> to vector<32x512xf32>
    %48 = vector.broadcast %46 : vector<1x512xf32> to vector<32x512xf32>
    %49 = arith.mulf %47, %48 : vector<32x512xf32>
    %50 = arith.addf %44, %49 : vector<32x512xf32>
    %51 = vector.extract_strided_slice %0 {offsets = [0, 2], sizes = [32, 1], strides = [1, 1]} : vector<32x3xf32> to vector<32x1xf32>
    %52 = vector.extract_strided_slice %39 {offsets = [2, 0], sizes = [1, 512], strides = [1, 1]} : vector<3x512xf32> to vector<1x512xf32>
    %53 = vector.broadcast %51 : vector<32x1xf32> to vector<32x512xf32>
    %54 = vector.broadcast %52 : vector<1x512xf32> to vector<32x512xf32>
    %55 = arith.mulf %53, %54 : vector<32x512xf32>
    %56 = arith.addf %50, %55 : vector<32x512xf32>
    %57 = vector.broadcast %1 : vector<32x1xf32> to vector<32x512xf32>
    %58 = arith.addf %56, %57 : vector<32x512xf32>
    %59 = math.tanh %58 : vector<32x512xf32>
    %60 = vector.broadcast %2 : vector<32x1xf32> to vector<32x512xf32>
    %61 = arith.mulf %59, %60 : vector<32x512xf32>
    %cst_11 = arith.constant dense<0.000000e+00> : vector<512xf32>
    %62 = vector.multi_reduction <add>, %61, %cst_11 [0] : vector<32x512xf32> to vector<512xf32>
    %63 = vector.shape_cast %62 : vector<512xf32> to vector<1x512xf32>
    %64 = vector.broadcast %3 : vector<1x1xf32> to vector<1x512xf32>
    %65 = arith.addf %63, %64 : vector<1x512xf32>
    %c0_12 = arith.constant 0 : index
    %66 = arith.index_cast %37 : i32 to index
    %67 = vector.load %arg6[%c0_12, %66] : memref<1x1024xf32, #tpu.memory_space<vmem>>, vector<1x512xf32>
    tpu.vector_store %arg6[%c0_12, %66], %65 {strides = array<i32>} : memref<1x1024xf32, #tpu.memory_space<vmem>>, vector<1x512xf32>,
    %c2_i32 = arith.constant 2 : i32
    return
  }
  func.func @transform_0(%arg0: i32) -> (i32, i32) {
    %c0_i32 = arith.constant 0 : i32
    %c0_i32_0 = arith.constant 0 : i32
    return %c0_i32, %arg0 : i32, i32
  }
  func.func @transform_1(%arg0: i32) -> (i32, i32) {
    %c0_i32 = arith.constant 0 : i32
    %c0_i32_0 = arith.constant 0 : i32
    %c0_i32_1 = arith.constant 0 : i32
    return %c0_i32, %c0_i32_0 : i32, i32
  }
  func.func @transform_2(%arg0: i32) -> (i32, i32) {
    %c0_i32 = arith.constant 0 : i32
    %c0_i32_0 = arith.constant 0 : i32
    %c0_i32_1 = arith.constant 0 : i32
    return %c0_i32, %c0_i32_0 : i32, i32
  }
  func.func @transform_3(%arg0: i32) -> (i32, i32) {
    %c0_i32 = arith.constant 0 : i32
    %c0_i32_0 = arith.constant 0 : i32
    %c0_i32_1 = arith.constant 0 : i32
    return %c0_i32, %c0_i32_0 : i32, i32
  }
  func.func @transform_4(%arg0: i32) -> (i32, i32) {
    %c0_i32 = arith.constant 0 : i32
    %c0_i32_0 = arith.constant 0 : i32
    %c0_i32_1 = arith.constant 0 : i32
    return %c0_i32, %c0_i32_0 : i32, i32
  }
  func.func @transform_5(%arg0: i32) -> (i32, i32) {
    %c0_i32 = arith.constant 0 : i32
    %c0_i32_0 = arith.constant 0 : i32
    return %c0_i32, %arg0 : i32, i32
  }
}

</mosaic_0001>

<llo_original>
// kernel: tpu_custom_call.1
$region0: #{tpu_custom_call.1}
  #allocation0 [shape = 'u32[]', space=smem, size = 0x4, offset = 0x4, fixed_abs, tag = 'smem constant byte address 0x4 - core index']
  #allocation1 [shape = 'u32[72,128]{1,0:T(1,128)}', space=vmem, size = 0x9000, scoped, tag = 'internal scratch']
  #allocation2 [shape = 'f32[1,1]{1,0:T(1,128)S(1)}', space=vmem, size = 0x200, scoped, tag = 'scoped memory for tpu_custom_call.1']
  %s0 = inlined_call_operand.vmem [shape: f32[3,2048], index: 0, kind: input, shape index: {}]
  %s1 = inlined_call_operand.vmem [shape: f32[32,3], index: 1, kind: input, shape index: {}]
  %s2 = inlined_call_operand.vmem [shape: f32[32,1], index: 2, kind: input, shape index: {}]
  %s3 = inlined_call_operand.vmem [shape: f32[32,1], index: 3, kind: input, shape index: {}]
  %s4 = inlined_call_operand.<no memory space> [shape: f32[1,1], index: 4, kind: input, shape index: {}]
  %s5 = inlined_call_operand.hbm [shape: f32[1,2048], index: 5, kind: output, shape index: {}]
  %s6 = sld [smem:[#allocation0]]
  $region53: #{tpu_custom_call.1} parent=0
    _
  %s8 = ssub.s32 1, %s6
  %s9 = scalar_select 0, %s8, %s6
  %v10 = vstv %s4
  %11 = vst [vmem:[#allocation2] sm:$0x1] %v10
  $region1: #{tpu_custom_call.1} parent=0
    #allocation3 [shape = 'u8[8192]{0}', space=vmem, size = 0x2000, scoped, tag = 'output window, operand 0']
    #allocation4 [shape = 's32[2]{0}', space=sflag, size = 0x8, scoped, tag = 'scoped memory for tpu_custom_call.1']
    %12 = vsyncpa [#allocation4], 0
    %s13 = scalar_lea.sflag [#allocation4], 1
    %14 = vsyncpa %s13, 0
    loop: start=0, step=1, limit=4
    $region2: #{tpu_custom_call.1} parent=1 // loop_pre_header
      _
    $region3: #{tpu_custom_call.1} parent=1 // loop_header
      %s16 = sphi 0, %s20
      %p17 = scmp.ge.s32.totalorder %s16, 4
      %s26 = sphi 0, %s28
      %s29 = sphi 0, %s26
      %s30 = sphi 0, %s29
      %s46 = sphi 0, %s30
      %s50 = sphi 0, %s50
      %s52 = sphi 0, %s50
      %s53 = sphi 0, %s52
      %s67 = sphi 0, %s53
      %s71 = sphi 0, %s71
      %s73 = sphi 0, %s71
      %s74 = sphi 0, %s73
      %s88 = sphi 0, %s74
      %s92 = sphi 0, %s92
      %s94 = sphi 0, %s92
      %s95 = sphi 0, %s94
      %s109 = sphi 0, %s95
      %s113 = sphi 0, %s113
      %s115 = sphi 0, %s113
      %s116 = sphi 0, %s115
      %s130 = sphi 0, %s116
      %s136 = sphi 0, %s138
      %s139 = sphi 0, %s136
      %s140 = sphi 0, %s139
      %s156 = sphi 0, %s140
    $region4: #{tpu_custom_call.1} parent=1 // loop_header_branch
      %19 = sbr.rel (%p17) target = $region8
    $region5: #{tpu_custom_call.1} parent=1 // loop_body
      %s21 = ssub.s32 %s16, 1
      %s22 = ssub.s32 %s16, 2
      %s23 = sadd.s32 %s16, 1
      %s24 = ssub.s32 %s16, %s23
      %p25 = scmp.eq.s32.totalorder %s24, 0
      %s27 = sadd.s32 %s26, 1
      %s28 = scalar_select %p25, %s26, %s27
      %p31 = pneg %p25
      %p32 = scmp.eq.s32.totalorder %s16, 1
      %p33 = por %p31, %p32
      %p34 = scmp.ne.s32.totalorder %s26, %s29
      %p35 = scmp.eq.s32.totalorder %s16, 0
      %p36 = por %p34, %p35
      %p37 = scmp.ne.s32.totalorder %s26, %s29
      %p38 = scmp.eq.s32.totalorder %s21, 1
      %p39 = por %p37, %p38
      %p40 = scmp.ne.s32.totalorder %s29, %s30
      %p41 = scmp.eq.s32.totalorder %s21, 0
      %p42 = por %p40, %p41
      %p43 = scmp.ne.s32.totalorder %s29, %s30
      %p44 = scmp.eq.s32.totalorder %s22, 1
      %p45 = por %p43, %p44
      %p47 = scmp.ne.s32.totalorder %s30, %s46
      %p48 = scmp.eq.s32.totalorder %s22, 0
      %p49 = por %p47, %p48
      %s51 = sadd.s32 %s50, 1
      %p54 = scmp.eq.s32.totalorder %s16, 1
      %p55 = scmp.ne.s32.totalorder %s50, %s52
      %p56 = scmp.eq.s32.totalorder %s16, 0
      %p57 = por %p55, %p56
      %p58 = scmp.ne.s32.totalorder %s50, %s52
      %p59 = scmp.eq.s32.totalorder %s21, 1
      %p60 = por %p58, %p59
      %p61 = scmp.ne.s32.totalorder %s52, %s53
      %p62 = scmp.eq.s32.totalorder %s21, 0
      %p63 = por %p61, %p62
      %p64 = scmp.ne.s32.totalorder %s52, %s53
      %p65 = scmp.eq.s32.totalorder %s22, 1
      %p66 = por %p64, %p65
      %p68 = scmp.ne.s32.totalorder %s53, %s67
      %p69 = scmp.eq.s32.totalorder %s22, 0
      %p70 = por %p68, %p69
      %s72 = sadd.s32 %s71, 1
      %p75 = scmp.eq.s32.totalorder %s16, 1
      %p76 = scmp.ne.s32.totalorder %s71, %s73
      %p77 = scmp.eq.s32.totalorder %s16, 0
      %p78 = por %p76, %p77
      %p79 = scmp.ne.s32.totalorder %s71, %s73
      %p80 = scmp.eq.s32.totalorder %s21, 1
      %p81 = por %p79, %p80
      %p82 = scmp.ne.s32.totalorder %s73, %s74
      %p83 = scmp.eq.s32.totalorder %s21, 0
      %p84 = por %p82, %p83
      %p85 = scmp.ne.s32.totalorder %s73, %s74
      %p86 = scmp.eq.s32.totalorder %s22, 1
      %p87 = por %p85, %p86
      %p89 = scmp.ne.s32.totalorder %s74, %s88
      %p90 = scmp.eq.s32.totalorder %s22, 0
      %p91 = por %p89, %p90
      %s93 = sadd.s32 %s92, 1
      %p96 = scmp.eq.s32.totalorder %s16, 1
      %p97 = scmp.ne.s32.totalorder %s92, %s94
      %p98 = scmp.eq.s32.totalorder %s16, 0
      %p99 = por %p97, %p98
      %p100 = scmp.ne.s32.totalorder %s92, %s94
      %p101 = scmp.eq.s32.totalorder %s21, 1
      %p102 = por %p100, %p101
      %p103 = scmp.ne.s32.totalorder %s94, %s95
      %p104 = scmp.eq.s32.totalorder %s21, 0
      %p105 = por %p103, %p104
      %p106 = scmp.ne.s32.totalorder %s94, %s95
      %p107 = scmp.eq.s32.totalorder %s22, 1
      %p108 = por %p106, %p107
      %p110 = scmp.ne.s32.totalorder %s95, %s109
      %p111 = scmp.eq.s32.totalorder %s22, 0
      %p112 = por %p110, %p111
      %s114 = sadd.s32 %s113, 1
      %p117 = scmp.eq.s32.totalorder %s16, 1
      %p118 = scmp.ne.s32.totalorder %s113, %s115
      %p119 = scmp.eq.s32.totalorder %s16, 0
      %p120 = por %p118, %p119
      %p121 = scmp.ne.s32.totalorder %s113, %s115
      %p122 = scmp.eq.s32.totalorder %s21, 1
      %p123 = por %p121, %p122
      %p124 = scmp.ne.s32.totalorder %s115, %s116
      %p125 = scmp.eq.s32.totalorder %s21, 0
      %p126 = por %p124, %p125
      %p127 = scmp.ne.s32.totalorder %s115, %s116
      %p128 = scmp.eq.s32.totalorder %s22, 1
      %p129 = por %p127, %p128
      %p131 = scmp.ne.s32.totalorder %s116, %s130
      %p132 = scmp.eq.s32.totalorder %s22, 0
      %p133 = por %p131, %p132
      %s134 = ssub.s32 %s16, %s23
      %p135 = scmp.eq.s32.totalorder %s134, 0
      %s137 = sadd.s32 %s136, 1
      %s138 = scalar_select %p135, %s136, %s137
      %p141 = pneg %p135
      %p142 = scmp.eq.s32.totalorder %s16, 1
      %p143 = por %p141, %p142
      %p144 = scmp.ne.s32.totalorder %s136, %s139
      %p145 = scmp.eq.s32.totalorder %s16, 0
      %p146 = por %p144, %p145
      %p147 = scmp.ne.s32.totalorder %s136, %s139
      %p148 = scmp.eq.s32.totalorder %s21, 1
      %p149 = por %p147, %p148
      %p150 = scmp.ne.s32.totalorder %s139, %s140
      %p151 = scmp.eq.s32.totalorder %s21, 0
      %p152 = por %p150, %p151
      %p153 = scmp.ne.s32.totalorder %s139, %s140
      %p154 = scmp.eq.s32.totalorder %s22, 1
      %p155 = por %p153, %p154
      %p157 = scmp.ne.s32.totalorder %s140, %s156
      %p158 = scmp.eq.s32.totalorder %s22, 0
      %p159 = por %p157, %p158
      %p160 = scmp.le.s32.totalorder 1, %s16
      %p161 = scmp.lt.s32.totalorder %s16, 3
      %p162 = pnand %p160, %p161
      %p163 = pneg %p162
      // Predicated region
      $region9: #{tpu_custom_call.1} parent=5 // pred_check
        _
      $region10: #{tpu_custom_call.1} parent=5 // pred_check_branch
        %165 = sbr.rel (%p162) target = $region12
      $region11: #{tpu_custom_call.1} parent=5 // pred_region
        %s166 = ssub.s32 %s16, 1
        // Predicated region
        $region13: #{tpu_custom_call.1} parent=11 // pred_check
          %p167 = pneg %p63
        $region14: #{tpu_custom_call.1} parent=11 // pred_check_branch
          %169 = sbr.rel (%p167) target = $region16
        $region15: #{tpu_custom_call.1} parent=11 // pred_region
          _
        $region16: #{tpu_custom_call.1} parent=11 // pred_fallthru
          _
        // Predicated region
        $region17: #{tpu_custom_call.1} parent=11 // pred_check
          %p170 = pneg %p84
        $region18: #{tpu_custom_call.1} parent=11 // pred_check_branch
          %172 = sbr.rel (%p170) target = $region20
        $region19: #{tpu_custom_call.1} parent=11 // pred_region
          _
        $region20: #{tpu_custom_call.1} parent=11 // pred_fallthru
          _
        // Predicated region
        $region21: #{tpu_custom_call.1} parent=11 // pred_check
          %p173 = pneg %p105
        $region22: #{tpu_custom_call.1} parent=11 // pred_check_branch
          %175 = sbr.rel (%p173) target = $region24
        $region23: #{tpu_custom_call.1} parent=11 // pred_region
          _
        $region24: #{tpu_custom_call.1} parent=11 // pred_fallthru
          _
        // Predicated region
        $region25: #{tpu_custom_call.1} parent=11 // pred_check
          %p176 = pneg %p126
        $region26: #{tpu_custom_call.1} parent=11 // pred_check_branch
          %178 = sbr.rel (%p176) target = $region28
        $region27: #{tpu_custom_call.1} parent=11 // pred_region
          _
        $region28: #{tpu_custom_call.1} parent=11 // pred_fallthru
          _
      $region12: #{tpu_custom_call.1} parent=5 // pred_fallthru
        _
      %p179 = scmp.lt.s32.totalorder %s16, 2
      // Predicated region
      $region29: #{tpu_custom_call.1} parent=5 // pred_check
        %p180 = pneg %p179
      $region30: #{tpu_custom_call.1} parent=5 // pred_check_branch
        %182 = sbr.rel (%p180) target = $region32
      $region31: #{tpu_custom_call.1} parent=5 // pred_region
        // Predicated region
        $region33: #{tpu_custom_call.1} parent=31 // pred_check
          %p183 = pneg %p36
        $region34: #{tpu_custom_call.1} parent=31 // pred_check_branch
          %185 = sbr.rel (%p183) target = $region36
        $region35: #{tpu_custom_call.1} parent=31 // pred_region
          %s186 = smul.u32 8, %s16
          %p187 = scmp.lt.s32.totalorder %s186, 15
          %s188 = scalar_select %p187, %s186, 15
          %s189 = smul.addr %s188, 4
          %s190 = scalar_lea.vmem %s0, %s189
          %s191 = smul.u32 8, %s16
        $region36: #{tpu_custom_call.1} parent=31 // pred_fallthru
          _
      $region32: #{tpu_custom_call.1} parent=5 // pred_fallthru
        _
      %p192 = scmp.le.s32.totalorder 1, %s16
      %p193 = scmp.lt.s32.totalorder %s16, 3
      %p194 = pnand %p192, %p193
      %p195 = pneg %p194
      // Predicated region
      $region37: #{tpu_custom_call.1} parent=5 // pred_check
        _
      $region38: #{tpu_custom_call.1} parent=5 // pred_check_branch
        %197 = sbr.rel (%p194) target = $region40
      $region39: #{tpu_custom_call.1} parent=5 // pred_region
        %s198 = ssub.s32 %s16, 1
        %s199 = smul.u32 8, %s21
        %p200 = scmp.lt.s32.totalorder %s199, 15
        %s201 = scalar_select %p200, %s199, 15
        %s202 = smul.addr %s201, 4
        %s203 = scalar_lea.vmem %s0, %s202
        %p204 = pneg %p42
        %p205 = pneg %p39
        %p206 = pneg %p63
        %p207 = pneg %p60
        %p208 = pneg %p84
        %p209 = pneg %p81
        %p210 = pneg %p105
        %p211 = pneg %p102
        %p212 = pneg %p126
        %p213 = pneg %p123
        %p214 = pneg %p152
        %p215 = pneg %p149
        %s216 = sand.u32 %s139, 1
        %s217 = scalar_lea.sflag [#allocation4], %s216
        %s218 = sand.u32 %s139, 1
        %s219 = smul.addr %s218, 8
        %s220 = scalar_lea.vmem [#allocation3], %s219
        %s221 = smul.u32 8, %s21
        %p222 = scmp.lt.s32.totalorder %s221, 15
        %s223 = scalar_select %p222, %s221, 15
        %s224 = smul.addr %s223, 4
        %s225 = scalar_lea.vmem %s0, %s224
        %s226 = smul.u32 8, %s21
        %s227 = smul.u32 8, %s21
        %v228 = vld [vmem:[%s1] sm:$0xff]
        %v229 = vld [vmem:[%s1 + $0x8] sm:$0xff]
        %v230 = vld [vmem:[%s1 + $0x10] sm:$0xff]
        %v231 = vld [vmem:[%s1 + $0x18] sm:$0xff]
        %v232 = vld [vmem:[%s2] sm:$0xff]
        %v233 = vld [vmem:[%s2 + $0x8] sm:$0xff]
        %v234 = vld [vmem:[%s2 + $0x10] sm:$0xff]
        %v235 = vld [vmem:[%s2 + $0x18] sm:$0xff]
        %v236 = vld [vmem:[%s3] sm:$0xff]
        %v237 = vld [vmem:[%s3 + $0x8] sm:$0xff]
        %v238 = vld [vmem:[%s3 + $0x10] sm:$0xff]
        %v239 = vld [vmem:[%s3 + $0x18] sm:$0xff]
        %v240 = vld [vmem:[#allocation2] sm:$0x1]
        %v241 = vld [vmem:[%s225] sm:$0x77]
        %v242 = vld [vmem:[%s225 + $0x8] sm:$0x77]
        %244 = vset.pattern.permute.xlu0 0
        %245 = vperm.xlu0 %244, %v228
        %v246 = vpop.permute.xlu0 %245
        %249 = vset.pattern.permute.xlu0 0
        %250 = vperm.xlu0 %249, %v229
        %v251 = vpop.permute.xlu0 %250
        %254 = vset.pattern.permute.xlu0 0
        %255 = vperm.xlu0 %254, %v230
        %v256 = vpop.permute.xlu0 %255
        %259 = vset.pattern.permute.xlu0 0
        %260 = vperm.xlu0 %259, %v231
        %v261 = vpop.permute.xlu0 %260
        %v265 = vperm.slane %v241, 0
        %v266 = vperm.slane %v241, 4
        %v267 = vperm.slane %v242, 0
        %v268 = vperm.slane %v242, 4
        %v273 = vperm.slane %v265, 0
        %v274 = vperm.slane %v266, 0
        %v275 = vperm.slane %v267, 0
        %v276 = vperm.slane %v268, 0
        %v277 = vmul.f32 %v246, %v273
        %v278 = vmul.f32 %v246, %v274
        %v279 = vmul.f32 %v246, %v275
        %v280 = vmul.f32 %v246, %v276
        %v281 = vmul.f32 %v251, %v273
        %v282 = vmul.f32 %v251, %v274
        %v283 = vmul.f32 %v251, %v275
        %v284 = vmul.f32 %v251, %v276
        %v285 = vmul.f32 %v256, %v273
        %v286 = vmul.f32 %v256, %v274
        %v287 = vmul.f32 %v256, %v275
        %v288 = vmul.f32 %v256, %v276
        %v289 = vmul.f32 %v261, %v273
        %v290 = vmul.f32 %v261, %v274
        %v291 = vmul.f32 %v261, %v275
        %v292 = vmul.f32 %v261, %v276
        %293 = vset.pattern.permute.xlu0 1
        %294 = vperm.xlu0 %293, %v228
        %v295 = vpop.permute.xlu0 %294
        %297 = vset.pattern.permute.xlu0 1
        %298 = vperm.xlu0 %297, %v229
        %v299 = vpop.permute.xlu0 %298
        %301 = vset.pattern.permute.xlu0 1
        %302 = vperm.xlu0 %301, %v230
        %v303 = vpop.permute.xlu0 %302
        %305 = vset.pattern.permute.xlu0 1
        %306 = vperm.xlu0 %305, %v231
        %v307 = vpop.permute.xlu0 %306
        %v309 = vperm.slane %v241, 1
        %v310 = vperm.slane %v241, 5
        %v311 = vperm.slane %v242, 1
        %v312 = vperm.slane %v242, 5
        %v317 = vperm.slane %v309, 1
        %v318 = vperm.slane %v310, 1
        %v319 = vperm.slane %v311, 1
        %v320 = vperm.slane %v312, 1
        %v321 = vmul.f32 %v295, %v317
        %v322 = vmul.f32 %v295, %v318
        %v323 = vmul.f32 %v295, %v319
        %v324 = vmul.f32 %v295, %v320
        %v325 = vmul.f32 %v299, %v317
        %v326 = vmul.f32 %v299, %v318
        %v327 = vmul.f32 %v299, %v319
        %v328 = vmul.f32 %v299, %v320
        %v329 = vmul.f32 %v303, %v317
        %v330 = vmul.f32 %v303, %v318
        %v331 = vmul.f32 %v303, %v319
        %v332 = vmul.f32 %v303, %v320
        %v333 = vmul.f32 %v307, %v317
        %v334 = vmul.f32 %v307, %v318
        %v335 = vmul.f32 %v307, %v319
        %v336 = vmul.f32 %v307, %v320
        %v337 = vadd.f32 %v277, %v321
        %v338 = vadd.f32 %v278, %v322
        %v339 = vadd.f32 %v279, %v323
        %v340 = vadd.f32 %v280, %v324
        %v341 = vadd.f32 %v281, %v325
        %v342 = vadd.f32 %v282, %v326
        %v343 = vadd.f32 %v283, %v327
        %v344 = vadd.f32 %v284, %v328
        %v345 = vadd.f32 %v285, %v329
        %v346 = vadd.f32 %v286, %v330
        %v347 = vadd.f32 %v287, %v331
        %v348 = vadd.f32 %v288, %v332
        %v349 = vadd.f32 %v289, %v333
        %v350 = vadd.f32 %v290, %v334
        %v351 = vadd.f32 %v291, %v335
        %v352 = vadd.f32 %v292, %v336
        %353 = vset.pattern.permute.xlu0 2
        %354 = vperm.xlu0 %353, %v228
        %v355 = vpop.permute.xlu0 %354
        %357 = vset.pattern.permute.xlu0 2
        %358 = vperm.xlu0 %357, %v229
        %v359 = vpop.permute.xlu0 %358
        %361 = vset.pattern.permute.xlu0 2
        %362 = vperm.xlu0 %361, %v230
        %v363 = vpop.permute.xlu0 %362
        %365 = vset.pattern.permute.xlu0 2
        %366 = vperm.xlu0 %365, %v231
        %v367 = vpop.permute.xlu0 %366
        %v369 = vperm.slane %v241, 2
        %v370 = vperm.slane %v241, 6
        %v371 = vperm.slane %v242, 2
        %v372 = vperm.slane %v242, 6
        %v377 = vperm.slane %v369, 2
        %v378 = vperm.slane %v370, 2
        %v379 = vperm.slane %v371, 2
        %v380 = vperm.slane %v372, 2
        %v381 = vmul.f32 %v355, %v377
        %v382 = vmul.f32 %v355, %v378
        %v383 = vmul.f32 %v355, %v379
        %v384 = vmul.f32 %v355, %v380
        %v385 = vmul.f32 %v359, %v377
        %v386 = vmul.f32 %v359, %v378
        %v387 = vmul.f32 %v359, %v379
        %v388 = vmul.f32 %v359, %v380
        %v389 = vmul.f32 %v363, %v377
        %v390 = vmul.f32 %v363, %v378
        %v391 = vmul.f32 %v363, %v379
        %v392 = vmul.f32 %v363, %v380
        %v393 = vmul.f32 %v367, %v377
        %v394 = vmul.f32 %v367, %v378
        %v395 = vmul.f32 %v367, %v379
        %v396 = vmul.f32 %v367, %v380
        %v397 = vadd.f32 %v337, %v381
        %v398 = vadd.f32 %v338, %v382
        %v399 = vadd.f32 %v339, %v383
        %v400 = vadd.f32 %v340, %v384
        %v401 = vadd.f32 %v341, %v385
        %v402 = vadd.f32 %v342, %v386
        %v403 = vadd.f32 %v343, %v387
        %v404 = vadd.f32 %v344, %v388
        %v405 = vadd.f32 %v345, %v389
        %v406 = vadd.f32 %v346, %v390
        %v407 = vadd.f32 %v347, %v391
        %v408 = vadd.f32 %v348, %v392
        %v409 = vadd.f32 %v349, %v393
        %v410 = vadd.f32 %v350, %v394
        %v411 = vadd.f32 %v351, %v395
        %v412 = vadd.f32 %v352, %v396
        %414 = vset.pattern.permute.xlu0 0
        %415 = vperm.xlu0 %414, %v232
        %v416 = vpop.permute.xlu0 %415
        %419 = vset.pattern.permute.xlu0 0
        %420 = vperm.xlu0 %419, %v233
        %v421 = vpop.permute.xlu0 %420
        %424 = vset.pattern.permute.xlu0 0
        %425 = vperm.xlu0 %424, %v234
        %v426 = vpop.permute.xlu0 %425
        %429 = vset.pattern.permute.xlu0 0
        %430 = vperm.xlu0 %429, %v235
        %v431 = vpop.permute.xlu0 %430
        %v433 = vadd.f32 %v397, %v416
        %v434 = vadd.f32 %v398, %v416
        %v435 = vadd.f32 %v399, %v416
        %v436 = vadd.f32 %v400, %v416
        %v437 = vadd.f32 %v401, %v421
        %v438 = vadd.f32 %v402, %v421
        %v439 = vadd.f32 %v403, %v421
        %v440 = vadd.f32 %v404, %v421
        %v441 = vadd.f32 %v405, %v426
        %v442 = vadd.f32 %v406, %v426
        %v443 = vadd.f32 %v407, %v426
        %v444 = vadd.f32 %v408, %v426
        %v445 = vadd.f32 %v409, %v431
        %v446 = vadd.f32 %v410, %v431
        %v447 = vadd.f32 %v411, %v431
        %v448 = vadd.f32 %v412, %v431
        %v449 = vtanh.pop %v433
        %v450 = vtanh.pop %v434
        %v451 = vtanh.pop %v435
        %v452 = vtanh.pop %v436
        %v453 = vtanh.pop %v437
        %v454 = vtanh.pop %v438
        %v455 = vtanh.pop %v439
        %v456 = vtanh.pop %v440
        %v457 = vtanh.pop %v441
        %v458 = vtanh.pop %v442
        %v459 = vtanh.pop %v443
        %v460 = vtanh.pop %v444
        %v461 = vtanh.pop %v445
        %v462 = vtanh.pop %v446
        %v463 = vtanh.pop %v447
        %v464 = vtanh.pop %v448
        %466 = vset.pattern.permute.xlu0 0
        %467 = vperm.xlu0 %466, %v236
        %v468 = vpop.permute.xlu0 %467
        %471 = vset.pattern.permute.xlu0 0
        %472 = vperm.xlu0 %471, %v237
        %v473 = vpop.permute.xlu0 %472
        %476 = vset.pattern.permute.xlu0 0
        %477 = vperm.xlu0 %476, %v238
        %v478 = vpop.permute.xlu0 %477
        %481 = vset.pattern.permute.xlu0 0
        %482 = vperm.xlu0 %481, %v239
        %v483 = vpop.permute.xlu0 %482
        %v485 = vmul.f32 %v449, %v468
        %v486 = vmul.f32 %v450, %v468
        %v487 = vmul.f32 %v451, %v468
        %v488 = vmul.f32 %v452, %v468
        %v489 = vmul.f32 %v453, %v473
        %v490 = vmul.f32 %v454, %v473
        %v491 = vmul.f32 %v455, %v473
        %v492 = vmul.f32 %v456, %v473
        %v493 = vmul.f32 %v457, %v478
        %v494 = vmul.f32 %v458, %v478
        %v495 = vmul.f32 %v459, %v478
        %v496 = vmul.f32 %v460, %v478
        %v497 = vmul.f32 %v461, %v483
        %v498 = vmul.f32 %v462, %v483
        %v499 = vmul.f32 %v463, %v483
        %v500 = vmul.f32 %v464, %v483
        %v501 = vadd.f32 %v485, %v489
        %v502 = vadd.f32 %v501, %v493
        %v503 = vadd.f32 %v502, %v497
        %v504 = vrot.slane %v503, 4
        %v505 = vadd.f32 %v503, %v504
        %v506 = vrot.slane %v505, 2
        %v507 = vadd.f32 %v505, %v506
        %v508 = vrot.slane %v507, 1
        %v509 = vadd.f32 %v507, %v508
        %v510 = vadd.f32 %v486, %v490
        %v511 = vadd.f32 %v510, %v494
        %v512 = vadd.f32 %v511, %v498
        %v513 = vrot.slane %v512, 4
        %v514 = vadd.f32 %v512, %v513
        %v515 = vrot.slane %v514, 2
        %v516 = vadd.f32 %v514, %v515
        %v517 = vrot.slane %v516, 1
        %v518 = vadd.f32 %v516, %v517
        %v519 = vadd.f32 %v487, %v491
        %v520 = vadd.f32 %v519, %v495
        %v521 = vadd.f32 %v520, %v499
        %v522 = vrot.slane %v521, 4
        %v523 = vadd.f32 %v521, %v522
        %v524 = vrot.slane %v523, 2
        %v525 = vadd.f32 %v523, %v524
        %v526 = vrot.slane %v525, 1
        %v527 = vadd.f32 %v525, %v526
        %v528 = vadd.f32 %v488, %v492
        %v529 = vadd.f32 %v528, %v496
        %v530 = vadd.f32 %v529, %v500
        %v531 = vrot.slane %v530, 4
        %v532 = vadd.f32 %v530, %v531
        %v533 = vrot.slane %v532, 2
        %v534 = vadd.f32 %v532, %v533
        %v535 = vrot.slane %v534, 1
        %v536 = vadd.f32 %v534, %v535
        %538 = vset.pattern.permute.xlu0 0
        %539 = vperm.xlu0 %538, %v240
        %v540 = vpop.permute.xlu0 %539
        %v542 = vperm.slane %v540, 0
        %v543 = vadd.f32 %v509, %v542
        %v544 = vadd.f32 %v518, %v542
        %v545 = vadd.f32 %v527, %v542
        %v546 = vadd.f32 %v536, %v542
        %v551 = vrot.slane %v544, 7
        %v552 = vrot.slane %v545, 6
        %v553 = vrot.slane %v546, 5
        %vm554 = vcmask 1040384
        %v555 = vsel %vm554, %v543, %v551
        %vm556 = vcmask 1042434
        %v557 = vsel %vm556, %v552, %v553
        %vm558 = vcmask 1041408
        %v559 = vsel %vm558, %v555, %v557
        %v561 = vlaneseq
        %vm562 = vcmp.ge.s32.totalorder %v561, 0
        %vm563 = vcmp.lt.s32.totalorder %v561, 512
        %vm564 = vmand %vm562, %vm563
        %565 = vst.msk [vmem:[%s220] sm:$0xf] %vm564, %v559
        %s566 = scalar_lea.vmem %s225, 16
        %v567 = vld [vmem:[%s566] sm:$0x77]
        %v568 = vld [vmem:[%s566 + $0x8] sm:$0x77]
        %v571 = vperm.slane %v567, 0
        %v572 = vperm.slane %v567, 4
        %v573 = vperm.slane %v568, 0
        %v574 = vperm.slane %v568, 4
        %v579 = vperm.slane %v571, 0
        %v580 = vperm.slane %v572, 0
        %v581 = vperm.slane %v573, 0
        %v582 = vperm.slane %v574, 0
        %v583 = vmul.f32 %v246, %v579
        %v584 = vmul.f32 %v246, %v580
        %v585 = vmul.f32 %v246, %v581
        %v586 = vmul.f32 %v246, %v582
        %v587 = vmul.f32 %v251, %v579
        %v588 = vmul.f32 %v251, %v580
        %v589 = vmul.f32 %v251, %v581
        %v590 = vmul.f32 %v251, %v582
        %v591 = vmul.f32 %v256, %v579
        %v592 = vmul.f32 %v256, %v580
        %v593 = vmul.f32 %v256, %v581
        %v594 = vmul.f32 %v256, %v582
        %v595 = vmul.f32 %v261, %v579
        %v596 = vmul.f32 %v261, %v580
        %v597 = vmul.f32 %v261, %v581
        %v598 = vmul.f32 %v261, %v582
        %v599 = vperm.slane %v567, 1
        %v600 = vperm.slane %v567, 5
        %v601 = vperm.slane %v568, 1
        %v602 = vperm.slane %v568, 5
        %v607 = vperm.slane %v599, 1
        %v608 = vperm.slane %v600, 1
        %v609 = vperm.slane %v601, 1
        %v610 = vperm.slane %v602, 1
        %v611 = vmul.f32 %v295, %v607
        %v612 = vmul.f32 %v295, %v608
        %v613 = vmul.f32 %v295, %v609
        %v614 = vmul.f32 %v295, %v610
        %v615 = vmul.f32 %v299, %v607
        %v616 = vmul.f32 %v299, %v608
        %v617 = vmul.f32 %v299, %v609
        %v618 = vmul.f32 %v299, %v610
        %v619 = vmul.f32 %v303, %v607
        %v620 = vmul.f32 %v303, %v608
        %v621 = vmul.f32 %v303, %v609
        %v622 = vmul.f32 %v303, %v610
        %v623 = vmul.f32 %v307, %v607
        %v624 = vmul.f32 %v307, %v608
        %v625 = vmul.f32 %v307, %v609
        %v626 = vmul.f32 %v307, %v610
        %v627 = vadd.f32 %v583, %v611
        %v628 = vadd.f32 %v584, %v612
        %v629 = vadd.f32 %v585, %v613
        %v630 = vadd.f32 %v586, %v614
        %v631 = vadd.f32 %v587, %v615
        %v632 = vadd.f32 %v588, %v616
        %v633 = vadd.f32 %v589, %v617
        %v634 = vadd.f32 %v590, %v618
        %v635 = vadd.f32 %v591, %v619
        %v636 = vadd.f32 %v592, %v620
        %v637 = vadd.f32 %v593, %v621
        %v638 = vadd.f32 %v594, %v622
        %v639 = vadd.f32 %v595, %v623
        %v640 = vadd.f32 %v596, %v624
        %v641 = vadd.f32 %v597, %v625
        %v642 = vadd.f32 %v598, %v626
        %v643 = vperm.slane %v567, 2
        %v644 = vperm.slane %v567, 6
        %v645 = vperm.slane %v568, 2
        %v646 = vperm.slane %v568, 6
        %v651 = vperm.slane %v643, 2
        %v652 = vperm.slane %v644, 2
        %v653 = vperm.slane %v645, 2
        %v654 = vperm.slane %v646, 2
        %v655 = vmul.f32 %v355, %v651
        %v656 = vmul.f32 %v355, %v652
        %v657 = vmul.f32 %v355, %v653
        %v658 = vmul.f32 %v355, %v654
        %v659 = vmul.f32 %v359, %v651
        %v660 = vmul.f32 %v359, %v652
        %v661 = vmul.f32 %v359, %v653
        %v662 = vmul.f32 %v359, %v654
        %v663 = vmul.f32 %v363, %v651
        %v664 = vmul.f32 %v363, %v652
        %v665 = vmul.f32 %v363, %v653
        %v666 = vmul.f32 %v363, %v654
        %v667 = vmul.f32 %v367, %v651
        %v668 = vmul.f32 %v367, %v652
        %v669 = vmul.f32 %v367, %v653
        %v670 = vmul.f32 %v367, %v654
        %v671 = vadd.f32 %v627, %v655
        %v672 = vadd.f32 %v628, %v656
        %v673 = vadd.f32 %v629, %v657
        %v674 = vadd.f32 %v630, %v658
        %v675 = vadd.f32 %v631, %v659
        %v676 = vadd.f32 %v632, %v660
        %v677 = vadd.f32 %v633, %v661
        %v678 = vadd.f32 %v634, %v662
        %v679 = vadd.f32 %v635, %v663
        %v680 = vadd.f32 %v636, %v664
        %v681 = vadd.f32 %v637, %v665
        %v682 = vadd.f32 %v638, %v666
        %v683 = vadd.f32 %v639, %v667
        %v684 = vadd.f32 %v640, %v668
        %v685 = vadd.f32 %v641, %v669
        %v686 = vadd.f32 %v642, %v670
        %v687 = vadd.f32 %v671, %v416
        %v688 = vadd.f32 %v672, %v416
        %v689 = vadd.f32 %v673, %v416
        %v690 = vadd.f32 %v674, %v416
        %v691 = vadd.f32 %v675, %v421
        %v692 = vadd.f32 %v676, %v421
        %v693 = vadd.f32 %v677, %v421
        %v694 = vadd.f32 %v678, %v421
        %v695 = vadd.f32 %v679, %v426
        %v696 = vadd.f32 %v680, %v426
        %v697 = vadd.f32 %v681, %v426
        %v698 = vadd.f32 %v682, %v426
        %v699 = vadd.f32 %v683, %v431
        %v700 = vadd.f32 %v684, %v431
        %v701 = vadd.f32 %v685, %v431
        %v702 = vadd.f32 %v686, %v431
        %v703 = vtanh.pop %v687
        %v704 = vtanh.pop %v688
        %v705 = vtanh.pop %v689
        %v706 = vtanh.pop %v690
        %v707 = vtanh.pop %v691
        %v708 = vtanh.pop %v692
        %v709 = vtanh.pop %v693
        %v710 = vtanh.pop %v694
        %v711 = vtanh.pop %v695
        %v712 = vtanh.pop %v696
        %v713 = vtanh.pop %v697
        %v714 = vtanh.pop %v698
        %v715 = vtanh.pop %v699
        %v716 = vtanh.pop %v700
        %v717 = vtanh.pop %v701
        %v718 = vtanh.pop %v702
        %v719 = vmul.f32 %v703, %v468
        %v720 = vmul.f32 %v704, %v468
        %v721 = vmul.f32 %v705, %v468
        %v722 = vmul.f32 %v706, %v468
        %v723 = vmul.f32 %v707, %v473
        %v724 = vmul.f32 %v708, %v473
        %v725 = vmul.f32 %v709, %v473
        %v726 = vmul.f32 %v710, %v473
        %v727 = vmul.f32 %v711, %v478
        %v728 = vmul.f32 %v712, %v478
        %v729 = vmul.f32 %v713, %v478
        %v730 = vmul.f32 %v714, %v478
        %v731 = vmul.f32 %v715, %v483
        %v732 = vmul.f32 %v716, %v483
        %v733 = vmul.f32 %v717, %v483
        %v734 = vmul.f32 %v718, %v483
        %v735 = vadd.f32 %v719, %v723
        %v736 = vadd.f32 %v735, %v727
        %v737 = vadd.f32 %v736, %v731
        %v738 = vrot.slane %v737, 4
        %v739 = vadd.f32 %v737, %v738
        %v740 = vrot.slane %v739, 2
        %v741 = vadd.f32 %v739, %v740
        %v742 = vrot.slane %v741, 1
        %v743 = vadd.f32 %v741, %v742
        %v744 = vadd.f32 %v720, %v724
        %v745 = vadd.f32 %v744, %v728
        %v746 = vadd.f32 %v745, %v732
        %v747 = vrot.slane %v746, 4
        %v748 = vadd.f32 %v746, %v747
        %v749 = vrot.slane %v748, 2
        %v750 = vadd.f32 %v748, %v749
        %v751 = vrot.slane %v750, 1
        %v752 = vadd.f32 %v750, %v751
        %v753 = vadd.f32 %v721, %v725
        %v754 = vadd.f32 %v753, %v729
        %v755 = vadd.f32 %v754, %v733
        %v756 = vrot.slane %v755, 4
        %v757 = vadd.f32 %v755, %v756
        %v758 = vrot.slane %v757, 2
        %v759 = vadd.f32 %v757, %v758
        %v760 = vrot.slane %v759, 1
        %v761 = vadd.f32 %v759, %v760
        %v762 = vadd.f32 %v722, %v726
        %v763 = vadd.f32 %v762, %v730
        %v764 = vadd.f32 %v763, %v734
        %v765 = vrot.slane %v764, 4
        %v766 = vadd.f32 %v764, %v765
        %v767 = vrot.slane %v766, 2
        %v768 = vadd.f32 %v766, %v767
        %v769 = vrot.slane %v768, 1
        %v770 = vadd.f32 %v768, %v769
        %v771 = vadd.f32 %v743, %v542
        %v772 = vadd.f32 %v752, %v542
        %v773 = vadd.f32 %v761, %v542
        %v774 = vadd.f32 %v770, %v542
        %v779 = vrot.slane %v772, 7
        %v780 = vrot.slane %v773, 6
        %v781 = vrot.slane %v774, 5
        %v782 = vsel %vm554, %v771, %v779
        %v783 = vsel %vm556, %v780, %v781
        %v784 = vsel %vm558, %v782, %v783
        %s786 = scalar_lea.vmem %s220, 4 [#allocation3]
        %787 = vst.msk [vmem:[%s786] sm:$0xf] %vm564, %v784
        %s788 = sand.u32 %s139, 1
        %s789 = scalar_lea.sflag [#allocation4], %s788
        %s790 = sand.u32 %s139, 1
        %s791 = smul.addr %s790, 8
        %s792 = scalar_lea.vmem [#allocation3], %s791
        // Predicated region
        $region41: #{tpu_custom_call.1} parent=39 // pred_check
          %p793 = pneg %p149
        $region42: #{tpu_custom_call.1} parent=39 // pred_check_branch
          %795 = sbr.rel (%p793) target = $region44
        $region43: #{tpu_custom_call.1} parent=39 // pred_region
          %s796 = smul.u32 8, %s21
          %798 = vsyncadd %s789, 0
          %s799 = scalar_lea.hbm %s5, %s796
          %s801 = sshll.u32 %s792, 4
          %s802 = int_to_ptr.vmem [resolvable:$true] %s801
          %s803 = sshll.u32 %s799, 4
          %s804 = int_to_ptr.hbm [resolvable:$true] %s803
          %806 = dma.vmem_to_hbm [thread:$0]  %s802, 128, %s804, %s789
        $region44: #{tpu_custom_call.1} parent=39 // pred_fallthru
          _
      $region40: #{tpu_custom_call.1} parent=5 // pred_fallthru
        _
      %p807 = scmp.le.s32.totalorder 2, %s16
      // Predicated region
      $region45: #{tpu_custom_call.1} parent=5 // pred_check
        %p808 = pneg %p807
      $region46: #{tpu_custom_call.1} parent=5 // pred_check_branch
        %810 = sbr.rel (%p808) target = $region48
      $region47: #{tpu_custom_call.1} parent=5 // pred_region
        %s811 = ssub.s32 %s16, 2
        // Predicated region
        $region49: #{tpu_custom_call.1} parent=47 // pred_check
          %p812 = pneg %p155
        $region50: #{tpu_custom_call.1} parent=47 // pred_check_branch
          %814 = sbr.rel (%p812) target = $region52
        $region51: #{tpu_custom_call.1} parent=47 // pred_region
          %s815 = sand.u32 %s140, 1
          %s816 = scalar_lea.sflag [#allocation4], %s815
          %s817 = sand.u32 %s140, 1
          %s818 = smul.addr %s817, 8
          %s819 = scalar_lea.vmem [#allocation3], %s818
          %821 = dma.done %s816, 128
        $region52: #{tpu_custom_call.1} parent=47 // pred_fallthru
          _
      $region48: #{tpu_custom_call.1} parent=5 // pred_fallthru
        _
    $region6: #{tpu_custom_call.1} parent=1 // loop_footer
      %s20 = sadd.s32 1, %s16
    $region7: #{tpu_custom_call.1} parent=1 // loop_footer_branch
      %15 = sbr.rel target = $region3
    $region8: #{tpu_custom_call.1} parent=1 // loop_exit
      _
    %822 = vsyncpa [#allocation4], 1
    %s823 = scalar_lea.sflag [#allocation4], 1
    %824 = vsyncpa %s823, 1

</llo_original>
